<compile_context>
chip_gen: v5e
topology: v5e:2x2
jax: 0.10.0
libtpu: 0.0.40
codegen_flags: <defaults>
</compile_context>

<pallas_src>
import functools

import jax
import jax.numpy as jnp
from jax.experimental import pallas as pl
from jax.experimental.pallas import tpu as pltpu

_LANE = 128      # lane width (last dim)
_SUBLANE = 8     # f32 sublane width (second-to-last dim)

# Lazily resolved: can weight/bias BlockSpecs use pipeline_mode=pl.Buffered(1)?
_SINGLE_BUFFER_WEIGHTS_OK = None


def _cdiv(a, b):
    return -(-a // b)


def _round_up(x, m):
    return _cdiv(x, m) * m


def _fused_mlp_kernel(*refs, depth, compute_dtype, act):
    """Fused MLP. refs = (x, W0, b0, W1, b1, ..., W_{d-1}, b_{d-1}, out).

    Weights are pre-transposed to (in, out); hidden widths are zero-padded to
    128 multiples (padded lanes contribute exactly zero).  Matmuls accumulate
    in f32; the bias/act epilogue is f32 (v5e-safe); one cast per layer back to
    the compute dtype feeds the next MXU pass (no-op for f32 compute).
    """
    x_ref = refs[0]
    o_ref = refs[1 + 2 * depth]

    y = x_ref[...]                       # already compute_dtype (cast in wrapper)
    for i in range(depth):
        w_ref = refs[1 + 2 * i]
        b_ref = refs[2 + 2 * i]
        y = jnp.dot(y, w_ref[...], preferred_element_type=jnp.float32)
        y = y + b_ref[...]               # bias kept f32
        if i < depth - 1:
            y = act(y).astype(compute_dtype)
    o_ref[...] = y.astype(o_ref.dtype)


def prepare_mlp_params(params, compute_dtype=jnp.float32, pad_output=False):
    """One-time parameter prep (hoisted off the forward hot path).

    params: list of (W, b) with W shaped (out_features, in_features) exactly
    like nn.Linear.  Returns list of (W_t, b_row, in_f, out_f) where:
      * layer 0's K dim is the TRUE in_features (the input is not lane-padded),
      * hidden layers' K/N dims are zero-padded to 128 multiples (lane-dense),
      * the last layer's N dim is the true out_features unless pad_output.
    b_row is (1, N) f32.
    """
    depth = len(params)
    prepped = []
    for i, (w, b) in enumerate(params):
        out_f, in_f = w.shape
        k = in_f if i == 0 else _round_up(in_f, _LANE)
        if i < depth - 1 or pad_output:
            n = _round_up(out_f, _LANE)
        else:
            n = out_f
        w_t = jnp.zeros((k, n), compute_dtype)
        w_t = w_t.at[:in_f, :out_f].set(jnp.transpose(w).astype(compute_dtype))
        b_row = jnp.zeros((1, n), jnp.float32)
        b_row = b_row.at[0, :out_f].set(b.astype(jnp.float32))
        prepped.append((w_t, b_row, in_f, out_f))
    return prepped


def mlp_forward(x, prepped_params, *, batch_tile=1024, act=None):
    """Fused MLP forward.  x: (batch, in_features)."""
    global _SINGLE_BUFFER_WEIGHTS_OK

    depth = len(prepped_params)
    batch, in_f = x.shape
    assert in_f == prepped_params[0][2], "x feature dim mismatch"
    compute_dtype = jnp.dtype(prepped_params[0][0].dtype)
    out_f = prepped_params[-1][3]
    out_n = prepped_params[-1][0].shape[1]        # emitted width (out_f or padded)
    out_dtype = x.dtype
    act_fn = act if act is not None else (lambda v: jnp.maximum(v, 0.0))

    # Sublane multiple: 8 for f32 blocks, 16 if any bf16 block is in play.
    min_itemsize = min(compute_dtype.itemsize, jnp.dtype(out_dtype).itemsize)
    sub = _SUBLANE * (4 // min_itemsize)

    # ---- generation-aware VMEM budget ------------------------------------
    try:
        vmem_cap = int(pltpu.get_tpu_info().vmem_capacity_bytes)
    except Exception:
        vmem_cap = 64 * 1024 * 1024               # conservative (v7x per-TC)
    vmem_budget = int(vmem_cap * 0.75)

    # Weights/biases are single-buffered & VMEM-resident for the whole call.
    fixed_bytes = sum(w.size * w.dtype.itemsize + b.size * b.dtype.itemsize
                      for (w, b, _, _) in prepped_params)

    def per_tile_bytes(tb_):
        bts = 2 * tb_ * in_f * compute_dtype.itemsize              # input (2 bufs)
        bts += 2 * tb_ * out_n * jnp.dtype(out_dtype).itemsize     # output (2 bufs)
        for (w, _, _, _) in prepped_params:                        # f32 intermediates
            bts += tb_ * w.shape[1] * 4
        return bts

    # ---- batch-tile selection --------------------------------------------
    b_pad = _round_up(batch, sub)
    n_tiles = max(1, _cdiv(b_pad, batch_tile))
    if b_pad >= 2 * sub:
        # Even grid (>= 2 steps) so both v7x TensorCores get work; the extra
        # ~0.35us grid step is noise on single-TC chips.
        if n_tiles < 2:
            n_tiles = 2
        elif n_tiles % 2:
            n_tiles += 1
    tb = _round_up(_cdiv(b_pad, n_tiles), sub)
    while fixed_bytes + per_tile_bytes(tb) > vmem_budget and tb > sub:
        n_tiles *= 2
        tb = _round_up(_cdiv(b_pad, n_tiles), sub)
    b_pad = tb * n_tiles

    need = fixed_bytes + per_tile_bytes(tb)
    vmem_limit = int(min(max(2 * need, 32 << 20, need + (4 << 20)),
                         vmem_cap * 0.9))

    # ---- input prep: cast once; pad batch rows only if needed -------------
    if b_pad != batch:
        x_in = jnp.zeros((b_pad, in_f), compute_dtype)
        x_in = x_in.at[:batch].set(x.astype(compute_dtype))
    elif x.dtype != compute_dtype:
        x_in = x.astype(compute_dtype)
    else:
        x_in = x

    args = [x_in]
    flops = 0
    bytes_accessed = (x_in.size * x_in.dtype.itemsize
                      + b_pad * out_n * jnp.dtype(out_dtype).itemsize)
    for (w_t, b_row, _, _) in prepped_params:
        args.append(w_t)
        args.append(b_row)
        flops += 2 * b_pad * w_t.shape[0] * w_t.shape[1]
        bytes_accessed += (w_t.size * w_t.dtype.itemsize
                           + b_row.size * b_row.dtype.itemsize)

    kernel = functools.partial(_fused_mlp_kernel, depth=depth,
                               compute_dtype=compute_dtype, act=act_fn)

    def build_and_call(weight_mode):
        in_specs = [pl.BlockSpec((tb, in_f), lambda i: (i, 0))]
        for (w_t, b_row, _, _) in prepped_params:
            if weight_mode is None:
                in_specs.append(pl.BlockSpec(w_t.shape, lambda i: (0, 0)))
                in_specs.append(pl.BlockSpec(b_row.shape, lambda i: (0, 0)))
            else:
                in_specs.append(pl.BlockSpec(w_t.shape, lambda i: (0, 0),
                                             pipeline_mode=weight_mode))
                in_specs.append(pl.BlockSpec(b_row.shape, lambda i: (0, 0),
                                             pipeline_mode=weight_mode))
        return pl.pallas_call(
            kernel,
            out_shape=jax.ShapeDtypeStruct((b_pad, out_n), out_dtype),
            grid=(n_tiles,),
            in_specs=in_specs,
            out_specs=pl.BlockSpec((tb, out_n), lambda i: (i, 0)),
            compiler_params=pltpu.CompilerParams(
                dimension_semantics=("parallel",),
                vmem_limit_bytes=vmem_limit),
            cost_estimate=pl.CostEstimate(
                flops=int(flops), transcendentals=0,
                bytes_accessed=int(bytes_accessed)),
        )(*args)

    if _SINGLE_BUFFER_WEIGHTS_OK is False:
        out_padded = build_and_call(None)
    else:
        try:
            out_padded = build_and_call(pl.Buffered(1))
            if _SINGLE_BUFFER_WEIGHTS_OK is None:
                jax.block_until_ready(out_padded)   # surface lowering errors once
                _SINGLE_BUFFER_WEIGHTS_OK = True
        except Exception:
            _SINGLE_BUFFER_WEIGHTS_OK = False
            out_padded = build_and_call(None)

    out = out_padded
    if b_pad != batch:
        out = out[:batch]
    if out_n != out_f:
        out = out[:, :out_f]
    return out


def init_mlp_params(key, units_list, dtype=jnp.float32):
    """Synthetic init matching nn.Linear parameter shapes:
    W_i: (units_list[i+1], units_list[i]), b_i: (units_list[i+1],)."""
    params = []
    depth = len(units_list) - 1
    for i in range(depth):
        key, kw, kb = jax.random.split(key, 3)
        fan_in = units_list[i]
        bound = 1.0 / (fan_in ** 0.5)
        w = jax.random.uniform(kw, (units_list[i + 1], units_list[i]),
                               minval=-bound, maxval=bound, dtype=dtype)
        b = jax.random.uniform(kb, (units_list[i + 1],),
                               minval=-bound, maxval=bound, dtype=dtype)
        params.append((w, b))
    return params


def _reference_forward(x, params):
    """Pure-JAX reference identical to MLP.forward with act_fn = ReLU."""
    depth = len(params)
    y = x
    for i, (w, b) in enumerate(params):
        y = jnp.dot(y, w.T, precision=jax.lax.Precision.HIGHEST) + b
        if i < depth - 1:
            y = jnp.maximum(y, 0.0)
    return y


if __name__ == "__main__":
    key = jax.random.PRNGKey(0)
    key, kx = jax.random.split(key)

    # Small shapes consistent with MLP(units_list=[32, 64, 64, 16], act_fn=relu)
    units_list = [32, 64, 64, 16]
    batch = 8
    x = jax.random.normal(kx, (batch, units_list[0]), dtype=jnp.float32)
    params = init_mlp_params(key, units_list)

    # --- f32 path (matches the f32 nn.Linear module numerics) ---------------
    prepped_f32 = prepare_mlp_params(params, compute_dtype=jnp.float32)
    out = mlp_forward(x, prepped_f32)
    jax.block_until_ready(out)
    ref = _reference_forward(x, params)
    assert out.shape == (batch, units_list[-1])
    assert jnp.allclose(out, ref, atol=2e-4, rtol=2e-4)

    # --- multi-tile grid path (row padding + even grid for v7x megacore) ----
    key, kx2 = jax.random.split(key)
    batch2 = 300
    x2 = jax.random.normal(kx2, (batch2, units_list[0]), dtype=jnp.float32)
    out2 = mlp_forward(x2, prepped_f32, batch_tile=128)
    jax.block_until_ready(out2)
    ref2 = _reference_forward(x2, params)
    assert out2.shape == (batch2, units_list[-1])
    assert jnp.allclose(out2, ref2, atol=2e-4, rtol=2e-4)

    # --- bf16 MXU-operand path (recommended compute dtype on v6e/v7x) -------
    prepped_bf16 = prepare_mlp_params(params, compute_dtype=jnp.bfloat16)
    out_bf16 = mlp_forward(x, prepped_bf16)
    jax.block_until_ready(out_bf16)
    assert out_bf16.shape == (batch, units_list[-1])
    assert jnp.allclose(out_bf16.astype(jnp.float32), ref, atol=0.15, rtol=0.1)

    print("KERNEL_OK")
</pallas_src>

<mosaic_0001>
module attributes {stable_mosaic.version = 11 : i64} {
  func.func @_fused_mlp_kernel(%arg0: i32, %arg1: memref<8x32xf32, #tpu.memory_space<vmem>>, %arg2: memref<32x128xf32, #tpu.memory_space<vmem>>, %arg3: memref<1x128xf32, #tpu.memory_space<vmem>>, %arg4: memref<128x128xf32, #tpu.memory_space<vmem>>, %arg5: memref<1x128xf32, #tpu.memory_space<vmem>>, %arg6: memref<128x16xf32, #tpu.memory_space<vmem>>, %arg7: memref<1x16xf32, #tpu.memory_space<vmem>>, %arg8: memref<8x16xf32, #tpu.memory_space<vmem>>) attributes {dimension_semantics = [#tpu.dimension_semantics<parallel>], iteration_bounds = array<i64: 1>, scalar_prefetch = 0 : i64, scratch_operands = 0 : i64, tpu.core_type = #tpu.core_type<tc>, window_params = [{transform_indices = @transform_0, window_bounds = array<i64: 8, 32>}, {pipeline_mode = #tpu.pipeline_mode<synchronous>, transform_indices = @transform_1, window_bounds = array<i64: 32, 128>}, {pipeline_mode = #tpu.pipeline_mode<synchronous>, transform_indices = @transform_2, window_bounds = array<i64: 1, 128>}, {pipeline_mode = #tpu.pipeline_mode<synchronous>, transform_indices = @transform_3, window_bounds = array<i64: 128, 128>}, {pipeline_mode = #tpu.pipeline_mode<synchronous>, transform_indices = @transform_4, window_bounds = array<i64: 1, 128>}, {pipeline_mode = #tpu.pipeline_mode<synchronous>, transform_indices = @transform_5, window_bounds = array<i64: 128, 16>}, {pipeline_mode = #tpu.pipeline_mode<synchronous>, transform_indices = @transform_6, window_bounds = array<i64: 1, 16>}, {transform_indices = @transform_7, window_bounds = array<i64: 8, 16>}]} {
    %c0 = arith.constant 0 : index
    %c0_0 = arith.constant 0 : index
    %0 = vector.load %arg1[%c0, %c0_0] : memref<8x32xf32, #tpu.memory_space<vmem>>, vector<8x32xf32>
    %c0_1 = arith.constant 0 : index
    %c0_2 = arith.constant 0 : index
    %1 = vector.load %arg2[%c0_1, %c0_2] : memref<32x128xf32, #tpu.memory_space<vmem>>, vector<32x128xf32>
    %cst = arith.constant dense<0.000000e+00> : vector<8x128xf32>
    %2 = tpu.matmul %0, %1, %cst {dimension_numbers = #tpu.dot_dimension_numbers<[1], [0], [0], [1], [0, 0, 1, 1], [], []>} : vector<8x32xf32>, vector<32x128xf32>, vector<8x128xf32> -> vector<8x128xf32>
    %c0_3 = arith.constant 0 : index
    %c0_4 = arith.constant 0 : index
    %3 = vector.load %arg3[%c0_3, %c0_4] : memref<1x128xf32, #tpu.memory_space<vmem>>, vector<1x128xf32>
    %4 = vector.broadcast %3 : vector<1x128xf32> to vector<8x128xf32>
    %5 = arith.addf %2, %4 : vector<8x128xf32>
    %cst_5 = arith.constant 0.000000e+00 : f32
    %6 = vector.broadcast %cst_5 : f32 to vector<8x128xf32>
    %7 = arith.maximumf %5, %6 : vector<8x128xf32>
    %c0_6 = arith.constant 0 : index
    %c0_7 = arith.constant 0 : index
    %8 = vector.load %arg4[%c0_6, %c0_7] : memref<128x128xf32, #tpu.memory_space<vmem>>, vector<128x128xf32>
    %cst_8 = arith.constant dense<0.000000e+00> : vector<8x128xf32>
    %9 = tpu.matmul %7, %8, %cst_8 {dimension_numbers = #tpu.dot_dimension_numbers<[1], [0], [0], [1], [0, 0, 1, 1], [], []>} : vector<8x128xf32>, vector<128x128xf32>, vector<8x128xf32> -> vector<8x128xf32>
    %c0_9 = arith.constant 0 : index
    %c0_10 = arith.constant 0 : index
    %10 = vector.load %arg5[%c0_9, %c0_10] : memref<1x128xf32, #tpu.memory_space<vmem>>, vector<1x128xf32>
    %11 = vector.broadcast %10 : vector<1x128xf32> to vector<8x128xf32>
    %12 = arith.addf %9, %11 : vector<8x128xf32>
    %cst_11 = arith.constant 0.000000e+00 : f32
    %13 = vector.broadcast %cst_11 : f32 to vector<8x128xf32>
    %14 = arith.maximumf %12, %13 : vector<8x128xf32>
    %c0_12 = arith.constant 0 : index
    %c0_13 = arith.constant 0 : index
    %15 = vector.load %arg6[%c0_12, %c0_13] : memref<128x16xf32, #tpu.memory_space<vmem>>, vector<128x16xf32>
    %cst_14 = arith.constant dense<0.000000e+00> : vector<8x16xf32>
    %16 = tpu.matmul %14, %15, %cst_14 {dimension_numbers = #tpu.dot_dimension_numbers<[1], [0], [0], [1], [0, 0, 1, 1], [], []>} : vector<8x128xf32>, vector<128x16xf32>, vector<8x16xf32> -> vector<8x16xf32>
    %c0_15 = arith.constant 0 : index
    %c0_16 = arith.constant 0 : index
    %17 = vector.load %arg7[%c0_15, %c0_16] : memref<1x16xf32, #tpu.memory_space<vmem>>, vector<1x16xf32>
    %18 = vector.broadcast %17 : vector<1x16xf32> to vector<8x16xf32>
    %19 = arith.addf %16, %18 : vector<8x16xf32>
    %c0_17 = arith.constant 0 : index
    %c0_18 = arith.constant 0 : index
    %20 = vector.load %arg8[%c0_17, %c0_18] : memref<8x16xf32, #tpu.memory_space<vmem>>, vector<8x16xf32>
    tpu.vector_store %arg8[%c0_17, %c0_18], %19 {strides = array<i32>} : memref<8x16xf32, #tpu.memory_space<vmem>>, vector<8x16xf32>,
    return
  }
  func.func @transform_0(%arg0: i32) -> (i32, i32) {
    %c0_i32 = arith.constant 0 : i32
    %c0_i32_0 = arith.constant 0 : i32
    return %arg0, %c0_i32 : i32, i32
  }
  func.func @transform_1(%arg0: i32) -> (i32, i32) {
    %c0_i32 = arith.constant 0 : i32
    %c0_i32_0 = arith.constant 0 : i32
    %c0_i32_1 = arith.constant 0 : i32
    return %c0_i32, %c0_i32_0 : i32, i32
  }
  func.func @transform_2(%arg0: i32) -> (i32, i32) {
    %c0_i32 = arith.constant 0 : i32
    %c0_i32_0 = arith.constant 0 : i32
    %c0_i32_1 = arith.constant 0 : i32
    return %c0_i32, %c0_i32_0 : i32, i32
  }
  func.func @transform_3(%arg0: i32) -> (i32, i32) {
    %c0_i32 = arith.constant 0 : i32
    %c0_i32_0 = arith.constant 0 : i32
    %c0_i32_1 = arith.constant 0 : i32
    return %c0_i32, %c0_i32_0 : i32, i32
  }
  func.func @transform_4(%arg0: i32) -> (i32, i32) {
    %c0_i32 = arith.constant 0 : i32
    %c0_i32_0 = arith.constant 0 : i32
    %c0_i32_1 = arith.constant 0 : i32
    return %c0_i32, %c0_i32_0 : i32, i32
  }
  func.func @transform_5(%arg0: i32) -> (i32, i32) {
    %c0_i32 = arith.constant 0 : i32
    %c0_i32_0 = arith.constant 0 : i32
    %c0_i32_1 = arith.constant 0 : i32
    return %c0_i32, %c0_i32_0 : i32, i32
  }
  func.func @transform_6(%arg0: i32) -> (i32, i32) {
    %c0_i32 = arith.constant 0 : i32
    %c0_i32_0 = arith.constant 0 : i32
    %c0_i32_1 = arith.constant 0 : i32
    return %c0_i32, %c0_i32_0 : i32, i32
  }
  func.func @transform_7(%arg0: i32) -> (i32, i32) {
    %c0_i32 = arith.constant 0 : i32
    %c0_i32_0 = arith.constant 0 : i32
    return %arg0, %c0_i32 : i32, i32
  }
}

module attributes {stable_mosaic.version = 11 : i64} {
  func.func @_fused_mlp_kernel(%arg0: i32, %arg1: memref<8x32xf32, #tpu.memory_space<vmem>>, %arg2: memref<32x128xf32, #tpu.memory_space<vmem>>, %arg3: memref<1x128xf32, #tpu.memory_space<vmem>>, %arg4: memref<128x128xf32, #tpu.memory_space<vmem>>, %arg5: memref<1x128xf32, #tpu.memory_space<vmem>>, %arg6: memref<128x16xf32, #tpu.memory_space<vmem>>, %arg7: memref<1x16xf32, #tpu.memory_space<vmem>>, %arg8: memref<8x16xf32, #tpu.memory_space<vmem>>) attributes {dimension_semantics = [#tpu.dimension_semantics<parallel>], iteration_bounds = array<i64: 1>, scalar_prefetch = 0 : i64, scratch_operands = 0 : i64, tpu.core_type = #tpu.core_type<tc>, window_params = [{transform_indices = @transform_0, window_bounds = array<i64: 8, 32>}, {pipeline_mode = #tpu.pipeline_mode<synchronous>, transform_indices = @transform_1, window_bounds = array<i64: 32, 128>}, {pipeline_mode = #tpu.pipeline_mode<synchronous>, transform_indices = @transform_2, window_bounds = array<i64: 1, 128>}, {pipeline_mode = #tpu.pipeline_mode<synchronous>, transform_indices = @transform_3, window_bounds = array<i64: 128, 128>}, {pipeline_mode = #tpu.pipeline_mode<synchronous>, transform_indices = @transform_4, window_bounds = array<i64: 1, 128>}, {pipeline_mode = #tpu.pipeline_mode<synchronous>, transform_indices = @transform_5, window_bounds = array<i64: 128, 16>}, {pipeline_mode = #tpu.pipeline_mode<synchronous>, transform_indices = @transform_6, window_bounds = array<i64: 1, 16>}, {transform_indices = @transform_7, window_bounds = array<i64: 8, 16>}]} {
    %c0 = arith.constant 0 : index
    %c0_0 = arith.constant 0 : index
    %0 = vector.load %arg1[%c0, %c0_0] : memref<8x32xf32, #tpu.memory_space<vmem>>, vector<8x32xf32>
    %c0_1 = arith.constant 0 : index
    %c0_2 = arith.constant 0 : index
    %1 = vector.load %arg2[%c0_1, %c0_2] : memref<32x128xf32, #tpu.memory_space<vmem>>, vector<32x128xf32>
    %cst = arith.constant dense<0.000000e+00> : vector<8x128xf32>
    %2 = tpu.matmul %0, %1, %cst {dimension_numbers = #tpu.dot_dimension_numbers<[1], [0], [0], [1], [0, 0, 1, 1], [], []>} : vector<8x32xf32>, vector<32x128xf32>, vector<8x128xf32> -> vector<8x128xf32>
    %c0_3 = arith.constant 0 : index
    %c0_4 = arith.constant 0 : index
    %3 = vector.load %arg3[%c0_3, %c0_4] : memref<1x128xf32, #tpu.memory_space<vmem>>, vector<1x128xf32>
    %4 = vector.broadcast %3 : vector<1x128xf32> to vector<8x128xf32>
    %5 = arith.addf %2, %4 : vector<8x128xf32>
    %cst_5 = arith.constant 0.000000e+00 : f32
    %6 = vector.broadcast %cst_5 : f32 to vector<8x128xf32>
    %7 = arith.maximumf %5, %6 : vector<8x128xf32>
    %c0_6 = arith.constant 0 : index
    %c0_7 = arith.constant 0 : index
    %8 = vector.load %arg4[%c0_6, %c0_7] : memref<128x128xf32, #tpu.memory_space<vmem>>, vector<128x128xf32>
    %cst_8 = arith.constant dense<0.000000e+00> : vector<8x128xf32>
    %9 = tpu.matmul %7, %8, %cst_8 {dimension_numbers = #tpu.dot_dimension_numbers<[1], [0], [0], [1], [0, 0, 1, 1], [], []>} : vector<8x128xf32>, vector<128x128xf32>, vector<8x128xf32> -> vector<8x128xf32>
    %c0_9 = arith.constant 0 : index
    %c0_10 = arith.constant 0 : index
    %10 = vector.load %arg5[%c0_9, %c0_10] : memref<1x128xf32, #tpu.memory_space<vmem>>, vector<1x128xf32>
    %11 = vector.broadcast %10 : vector<1x128xf32> to vector<8x128xf32>
    %12 = arith.addf %9, %11 : vector<8x128xf32>
    %cst_11 = arith.constant 0.000000e+00 : f32
    %13 = vector.broadcast %cst_11 : f32 to vector<8x128xf32>
    %14 = arith.maximumf %12, %13 : vector<8x128xf32>
    %c0_12 = arith.constant 0 : index
    %c0_13 = arith.constant 0 : index
    %15 = vector.load %arg6[%c0_12, %c0_13] : memref<128x16xf32, #tpu.memory_space<vmem>>, vector<128x16xf32>
    %cst_14 = arith.constant dense<0.000000e+00> : vector<8x16xf32>
    %16 = tpu.matmul %14, %15, %cst_14 {dimension_numbers = #tpu.dot_dimension_numbers<[1], [0], [0], [1], [0, 0, 1, 1], [], []>} : vector<8x128xf32>, vector<128x16xf32>, vector<8x16xf32> -> vector<8x16xf32>
    %c0_15 = arith.constant 0 : index
    %c0_16 = arith.constant 0 : index
    %17 = vector.load %arg7[%c0_15, %c0_16] : memref<1x16xf32, #tpu.memory_space<vmem>>, vector<1x16xf32>
    %18 = vector.broadcast %17 : vector<1x16xf32> to vector<8x16xf32>
    %19 = arith.addf %16, %18 : vector<8x16xf32>
    %c0_17 = arith.constant 0 : index
    %c0_18 = arith.constant 0 : index
    %20 = vector.load %arg8[%c0_17, %c0_18] : memref<8x16xf32, #tpu.memory_space<vmem>>, vector<8x16xf32>
    tpu.vector_store %arg8[%c0_17, %c0_18], %19 {strides = array<i32>} : memref<8x16xf32, #tpu.memory_space<vmem>>, vector<8x16xf32>,
    return
  }
  func.func @transform_0(%arg0: i32) -> (i32, i32) {
    %c0_i32 = arith.constant 0 : i32
    %c0_i32_0 = arith.constant 0 : i32
    return %arg0, %c0_i32 : i32, i32
  }
  func.func @transform_1(%arg0: i32) -> (i32, i32) {
    %c0_i32 = arith.constant 0 : i32
    %c0_i32_0 = arith.constant 0 : i32
    %c0_i32_1 = arith.constant 0 : i32
    return %c0_i32, %c0_i32_0 : i32, i32
  }
  func.func @transform_2(%arg0: i32) -> (i32, i32) {
    %c0_i32 = arith.constant 0 : i32
    %c0_i32_0 = arith.constant 0 : i32
    %c0_i32_1 = arith.constant 0 : i32
    return %c0_i32, %c0_i32_0 : i32, i32
  }
  func.func @transform_3(%arg0: i32) -> (i32, i32) {
    %c0_i32 = arith.constant 0 : i32
    %c0_i32_0 = arith.constant 0 : i32
    %c0_i32_1 = arith.constant 0 : i32
    return %c0_i32, %c0_i32_0 : i32, i32
  }
  func.func @transform_4(%arg0: i32) -> (i32, i32) {
    %c0_i32 = arith.constant 0 : i32
    %c0_i32_0 = arith.constant 0 : i32
    %c0_i32_1 = arith.constant 0 : i32
    return %c0_i32, %c0_i32_0 : i32, i32
  }
  func.func @transform_5(%arg0: i32) -> (i32, i32) {
    %c0_i32 = arith.constant 0 : i32
    %c0_i32_0 = arith.constant 0 : i32
    %c0_i32_1 = arith.constant 0 : i32
    return %c0_i32, %c0_i32_0 : i32, i32
  }
  func.func @transform_6(%arg0: i32) -> (i32, i32) {
    %c0_i32 = arith.constant 0 : i32
    %c0_i32_0 = arith.constant 0 : i32
    %c0_i32_1 = arith.constant 0 : i32
    return %c0_i32, %c0_i32_0 : i32, i32
  }
  func.func @transform_7(%arg0: i32) -> (i32, i32) {
    %c0_i32 = arith.constant 0 : i32
    %c0_i32_0 = arith.constant 0 : i32
    return %arg0, %c0_i32 : i32, i32
  }
}

</mosaic_0001>

<llo_original>
// kernel: tpu_custom_call.1
$region0: #{tpu_custom_call.1}
  #allocation0 [shape = 'u32[]', space=smem, size = 0x4, offset = 0x4, fixed_abs, tag = 'smem constant byte address 0x4 - core index']
  #allocation1 [shape = 'u32[72,128]{1,0:T(1,128)}', space=vmem, size = 0x9000, scoped, tag = 'internal scratch']
  %s0 = inlined_call_operand.vmem [shape: f32[8,32], index: 0, kind: input, shape index: {}]
  %s1 = inlined_call_operand.hbm [shape: f32[32,128], index: 1, kind: input, shape index: {}]
  %s2 = inlined_call_operand.vmem [shape: f32[1,128], index: 2, kind: input, shape index: {}]
  %s3 = inlined_call_operand.vmem [shape: f32[128,128], index: 3, kind: input, shape index: {}]
  %s4 = inlined_call_operand.vmem [shape: f32[1,128], index: 4, kind: input, shape index: {}]
  %s5 = inlined_call_operand.vmem [shape: f32[128,16], index: 5, kind: input, shape index: {}]
  %s6 = inlined_call_operand.vmem [shape: f32[1,16], index: 6, kind: input, shape index: {}]
  %s7 = inlined_call_operand.hbm [shape: f32[8,16], index: 7, kind: output, shape index: {}]
  %s8 = sld [smem:[#allocation0]]
  $region42: #{tpu_custom_call.1} parent=0
    _
  %s10 = ssub.s32 1, %s8
  %s11 = scalar_select 0, %s10, %s8
  $region1: #{tpu_custom_call.1} parent=0
    #allocation2 [shape = 'u8[16384]{0}', space=vmem, size = 0x4000, scoped, tag = 'input window, operand 1, single buffered']
    #allocation3 [shape = 's32[1]{0}', space=sflag, size = 0x4, scoped, tag = 'scoped memory for tpu_custom_call.1']
    #allocation4 [shape = 's32[1]{0}', space=sflag, size = 0x4, scoped, tag = 'scoped memory for tpu_custom_call.1']
    #allocation5 [shape = 'u8[4096]{0}', space=vmem, size = 0x1000, scoped, tag = 'output window, operand 0, single buffered']
    %12 = vsyncpa [#allocation3], 0
    %13 = vsyncpa [#allocation4], 0
    // Predicated region
    $region2: #{tpu_custom_call.1} parent=1 // pred_check
      _
    $region3: #{tpu_custom_call.1} parent=1 // pred_check_branch
      %15 = sbr.rel (0) target = $region5
    $region4: #{tpu_custom_call.1} parent=1 // pred_region
      _
    $region5: #{tpu_custom_call.1} parent=1 // pred_fallthru
      _
    // Predicated region
    $region6: #{tpu_custom_call.1} parent=1 // pred_check
      _
    $region7: #{tpu_custom_call.1} parent=1 // pred_check_branch
      %17 = sbr.rel (0) target = $region9
    $region8: #{tpu_custom_call.1} parent=1 // pred_region
      %19 = vsyncadd [#allocation3], 0
      %s20 = sshll.u32 %s1, 4
      %s21 = int_to_ptr.hbm [resolvable:$true] %s20
      %s22 = sshll.u32 [#allocation2], 4
      %s23 = int_to_ptr.vmem [resolvable:$true] %s22
      %28 = dma.hbm_to_vmem [thread:$0]  %s21, 512, %s23, [#allocation3], 128, 128, 8
    $region9: #{tpu_custom_call.1} parent=1 // pred_fallthru
      _
    // Predicated region
    $region10: #{tpu_custom_call.1} parent=1 // pred_check
      _
    $region11: #{tpu_custom_call.1} parent=1 // pred_check_branch
      %30 = sbr.rel (0) target = $region13
    $region12: #{tpu_custom_call.1} parent=1 // pred_region
      _
    $region13: #{tpu_custom_call.1} parent=1 // pred_fallthru
      _
    // Predicated region
    $region14: #{tpu_custom_call.1} parent=1 // pred_check
      _
    $region15: #{tpu_custom_call.1} parent=1 // pred_check_branch
      %32 = sbr.rel (0) target = $region17
    $region16: #{tpu_custom_call.1} parent=1 // pred_region
      _
    $region17: #{tpu_custom_call.1} parent=1 // pred_fallthru
      _
    // Predicated region
    $region18: #{tpu_custom_call.1} parent=1 // pred_check
      _
    $region19: #{tpu_custom_call.1} parent=1 // pred_check_branch
      %34 = sbr.rel (0) target = $region21
    $region20: #{tpu_custom_call.1} parent=1 // pred_region
      _
    $region21: #{tpu_custom_call.1} parent=1 // pred_fallthru
      _
    // Predicated region
    $region22: #{tpu_custom_call.1} parent=1 // pred_check
      _
    $region23: #{tpu_custom_call.1} parent=1 // pred_check_branch
      %36 = sbr.rel (0) target = $region25
    $region24: #{tpu_custom_call.1} parent=1 // pred_region
      _
    $region25: #{tpu_custom_call.1} parent=1 // pred_fallthru
      _
    // Predicated region
    $region26: #{tpu_custom_call.1} parent=1 // pred_check
      _
    $region27: #{tpu_custom_call.1} parent=1 // pred_check_branch
      %38 = sbr.rel (0) target = $region29
    $region28: #{tpu_custom_call.1} parent=1 // pred_region
      _
    $region29: #{tpu_custom_call.1} parent=1 // pred_fallthru
      _
    // Predicated region
    $region30: #{tpu_custom_call.1} parent=1 // pred_check
      _
    $region31: #{tpu_custom_call.1} parent=1 // pred_check_branch
      %40 = sbr.rel (0) target = $region33
    $region32: #{tpu_custom_call.1} parent=1 // pred_region
      %42 = dma.done [#allocation3], 512
    $region33: #{tpu_custom_call.1} parent=1 // pred_fallthru
      _
    %v43 = vld [vmem:[%s0] sm:$0xff]
    %v44 = vld [vmem:[#allocation2] sm:$0xff]
    %v45 = vld [vmem:[#allocation2 + $0x8] sm:$0xff]
    %v46 = vld [vmem:[#allocation2 + $0x10] sm:$0xff]
    %v47 = vld [vmem:[#allocation2 + $0x18] sm:$0xff]
    %v48 = vld [vmem:[%s2] sm:$0x1]
    %v50 = vperm.slane %v48, 0
    %vm52 = vcmask 261120
    %v54 = vsel %vm52, %v43, 0
    %56 = vmatpush.msra.mxu0 0.0
    %57 = vmatpush.msra.mxu0 0.0
    %58 = vmatpush.msra.mxu0 0.0
    %59 = vmatpush.msra.mxu0 0.0
    %60 = vmatpush.msra.mxu0 0.0
    %61 = vmatpush.msra.mxu0 0.0
    %62 = vmatpush.msra.mxu0 0.0
    %63 = vmatpush.msra.mxu0 0.0
    %64 = vmatpush.msra.mxu0 0.0
    %65 = vmatpush.msra.mxu0 0.0
    %66 = vmatpush.msra.mxu0 0.0
    %67 = vmatpush.msra.mxu0 0.0
    %68 = vmatpush.msra.mxu0 %v47
    %69 = vmatpush.msra.mxu0 %v46
    %70 = vmatpush.msra.mxu0 %v45
    %71 = vmatpush.msra.mxu0 %v44
    %72 = vmatmul.f32.gmra.mxu0 %v54
    %v73 = vpop.f32.mrf.mxu0
    %v74 = vadd.f32 %v50, %v73
    %75 = vdwg.mxu0
    %v76 = vmax.f32 %v74, 0.0
    %v77 = vld [vmem:[%s3] sm:$0xff]
    %v78 = vld [vmem:[%s3 + $0x8] sm:$0xff]
    %v79 = vld [vmem:[%s3 + $0x10] sm:$0xff]
    %v80 = vld [vmem:[%s3 + $0x18] sm:$0xff]
    %v81 = vld [vmem:[%s3 + $0x20] sm:$0xff]
    %v82 = vld [vmem:[%s3 + $0x28] sm:$0xff]
    %v83 = vld [vmem:[%s3 + $0x30] sm:$0xff]
    %v84 = vld [vmem:[%s3 + $0x38] sm:$0xff]
    %v85 = vld [vmem:[%s3 + $0x40] sm:$0xff]
    %v86 = vld [vmem:[%s3 + $0x48] sm:$0xff]
    %v87 = vld [vmem:[%s3 + $0x50] sm:$0xff]
    %v88 = vld [vmem:[%s3 + $0x58] sm:$0xff]
    %v89 = vld [vmem:[%s3 + $0x60] sm:$0xff]
    %v90 = vld [vmem:[%s3 + $0x68] sm:$0xff]
    %v91 = vld [vmem:[%s3 + $0x70] sm:$0xff]
    %v92 = vld [vmem:[%s3 + $0x78] sm:$0xff]
    %v93 = vld [vmem:[%s4] sm:$0x1]
    %v95 = vperm.slane %v93, 0
    %97 = vmatpush.msra.mxu0 %v92
    %98 = vmatpush.msra.mxu0 %v91
    %99 = vmatpush.msra.mxu0 %v90
    %100 = vmatpush.msra.mxu0 %v89
    %101 = vmatpush.msra.mxu0 %v88
    %102 = vmatpush.msra.mxu0 %v87
    %103 = vmatpush.msra.mxu0 %v86
    %104 = vmatpush.msra.mxu0 %v85
    %105 = vmatpush.msra.mxu0 %v84
    %106 = vmatpush.msra.mxu0 %v83
    %107 = vmatpush.msra.mxu0 %v82
    %108 = vmatpush.msra.mxu0 %v81
    %109 = vmatpush.msra.mxu0 %v80
    %110 = vmatpush.msra.mxu0 %v79
    %111 = vmatpush.msra.mxu0 %v78
    %112 = vmatpush.msra.mxu0 %v77
    %113 = vmatmul.f32.gmra.mxu0 %v76
    %v114 = vpop.f32.mrf.mxu0
    %v115 = vadd.f32 %v95, %v114
    %116 = vdwg.mxu0
    %v117 = vmax.f32 %v115, 0.0
    %v118 = vld [vmem:[%s5] sm:$0xff]
    %v119 = vld [vmem:[%s5 + $0x8] sm:$0xff]
    %v120 = vld [vmem:[%s5 + $0x10] sm:$0xff]
    %v121 = vld [vmem:[%s5 + $0x18] sm:$0xff]
    %v122 = vld [vmem:[%s5 + $0x20] sm:$0xff]
    %v123 = vld [vmem:[%s5 + $0x28] sm:$0xff]
    %v124 = vld [vmem:[%s5 + $0x30] sm:$0xff]
    %v125 = vld [vmem:[%s5 + $0x38] sm:$0xff]
    %v126 = vld [vmem:[%s5 + $0x40] sm:$0xff]
    %v127 = vld [vmem:[%s5 + $0x48] sm:$0xff]
    %v128 = vld [vmem:[%s5 + $0x50] sm:$0xff]
    %v129 = vld [vmem:[%s5 + $0x58] sm:$0xff]
    %v130 = vld [vmem:[%s5 + $0x60] sm:$0xff]
    %v131 = vld [vmem:[%s5 + $0x68] sm:$0xff]
    %v132 = vld [vmem:[%s5 + $0x70] sm:$0xff]
    %v133 = vld [vmem:[%s5 + $0x78] sm:$0xff]
    %v134 = vld [vmem:[%s6] sm:$0x1]
    %v136 = vperm.slane %v134, 0
    %138 = vmatpush.msra.mxu0 %v133
    %139 = vmatpush.msra.mxu0 %v132
    %140 = vmatpush.msra.mxu0 %v131
    %141 = vmatpush.msra.mxu0 %v130
    %142 = vmatpush.msra.mxu0 %v129
    %143 = vmatpush.msra.mxu0 %v128
    %144 = vmatpush.msra.mxu0 %v127
    %145 = vmatpush.msra.mxu0 %v126
    %146 = vmatpush.msra.mxu0 %v125
    %147 = vmatpush.msra.mxu0 %v124
    %148 = vmatpush.msra.mxu0 %v123
    %149 = vmatpush.msra.mxu0 %v122
    %150 = vmatpush.msra.mxu0 %v121
    %151 = vmatpush.msra.mxu0 %v120
    %152 = vmatpush.msra.mxu0 %v119
    %153 = vmatpush.msra.mxu0 %v118
    %154 = vmatmul.f32.gmra.mxu0 %v117
    %v155 = vpop.f32.mrf.mxu0
    %v156 = vadd.f32 %v136, %v155
    %157 = vdwg.mxu0
    %vm158 = vcmask 130048
    %159 = vst.msk [vmem:[#allocation5] sm:$0xff] %vm158, %v156
    // Predicated region
    $region34: #{tpu_custom_call.1} parent=1 // pred_check
      _
    $region35: #{tpu_custom_call.1} parent=1 // pred_check_branch
      %161 = sbr.rel (0) target = $region37
    $region36: #{tpu_custom_call.1} parent=1 // pred_region
      %163 = vsyncadd [#allocation4], 0
      %s165 = sshll.u32 [#allocation5], 4
      %s166 = int_to_ptr.vmem [resolvable:$true] %s165
      %s167 = sshll.u32 %s7, 4
      %s168 = int_to_ptr.hbm [resolvable:$true] %s167
      %170 = dma.vmem_to_hbm [thread:$0]  %s166, 128, %s168, [#allocation4]
    $region37: #{tpu_custom_call.1} parent=1 // pred_fallthru
      _
    // Predicated region
    $region38: #{tpu_custom_call.1} parent=1 // pred_check
      _
    $region39: #{tpu_custom_call.1} parent=1 // pred_check_branch
      %172 = sbr.rel (0) target = $region41
    $region40: #{tpu_custom_call.1} parent=1 // pred_region
      %174 = dma.done [#allocation4], 128
    $region41: #{tpu_custom_call.1} parent=1 // pred_fallthru
      _
    %175 = vsyncpa [#allocation3], 1
    %176 = vsyncpa [#allocation4], 1

// kernel: tpu_custom_call.1
$region0: #{tpu_custom_call.1}
  #allocation0 [shape = 'u32[]', space=smem, size = 0x4, offset = 0x4, fixed_abs, tag = 'smem constant byte address 0x4 - core index']
  #allocation1 [shape = 'u32[72,128]{1,0:T(1,128)}', space=vmem, size = 0x9000, scoped, tag = 'internal scratch']
  %s0 = inlined_call_operand.vmem [shape: f32[8,32], index: 0, kind: input, shape index: {}]
  %s1 = inlined_call_operand.hbm [shape: f32[32,128], index: 1, kind: input, shape index: {}]
  %s2 = inlined_call_operand.vmem [shape: f32[1,128], index: 2, kind: input, shape index: {}]
  %s3 = inlined_call_operand.vmem [shape: f32[128,128], index: 3, kind: input, shape index: {}]
  %s4 = inlined_call_operand.vmem [shape: f32[1,128], index: 4, kind: input, shape index: {}]
  %s5 = inlined_call_operand.vmem [shape: f32[128,16], index: 5, kind: input, shape index: {}]
  %s6 = inlined_call_operand.vmem [shape: f32[1,16], index: 6, kind: input, shape index: {}]
  %s7 = inlined_call_operand.hbm [shape: f32[8,16], index: 7, kind: output, shape index: {}]
  %s8 = sld [smem:[#allocation0]]
  $region42: #{tpu_custom_call.1} parent=0
    _
  %s10 = ssub.s32 1, %s8
  %s11 = scalar_select 0, %s10, %s8
  $region1: #{tpu_custom_call.1} parent=0
    #allocation2 [shape = 'u8[16384]{0}', space=vmem, size = 0x4000, scoped, tag = 'input window, operand 1, single buffered']
    #allocation3 [shape = 's32[1]{0}', space=sflag, size = 0x4, scoped, tag = 'scoped memory for tpu_custom_call.1']
    #allocation4 [shape = 's32[1]{0}', space=sflag, size = 0x4, scoped, tag = 'scoped memory for tpu_custom_call.1']
    #allocation5 [shape = 'u8[4096]{0}', space=vmem, size = 0x1000, scoped, tag = 'output window, operand 0, single buffered']
    %12 = vsyncpa [#allocation3], 0
    %13 = vsyncpa [#allocation4], 0
    // Predicated region
    $region2: #{tpu_custom_call.1} parent=1 // pred_check
      _
    $region3: #{tpu_custom_call.1} parent=1 // pred_check_branch
      %15 = sbr.rel (0) target = $region5
    $region4: #{tpu_custom_call.1} parent=1 // pred_region
      _
    $region5: #{tpu_custom_call.1} parent=1 // pred_fallthru
      _
    // Predicated region
    $region6: #{tpu_custom_call.1} parent=1 // pred_check
      _
    $region7: #{tpu_custom_call.1} parent=1 // pred_check_branch
      %17 = sbr.rel (0) target = $region9
    $region8: #{tpu_custom_call.1} parent=1 // pred_region
      %19 = vsyncadd [#allocation3], 0
      %s20 = sshll.u32 %s1, 4
      %s21 = int_to_ptr.hbm [resolvable:$true] %s20
      %s22 = sshll.u32 [#allocation2], 4
      %s23 = int_to_ptr.vmem [resolvable:$true] %s22
      %28 = dma.hbm_to_vmem [thread:$0]  %s21, 512, %s23, [#allocation3], 128, 128, 8
    $region9: #{tpu_custom_call.1} parent=1 // pred_fallthru
      _
    // Predicated region
    $region10: #{tpu_custom_call.1} parent=1 // pred_check
      _
    $region11: #{tpu_custom_call.1} parent=1 // pred_check_branch
      %30 = sbr.rel (0) target = $region13
    $region12: #{tpu_custom_call.1} parent=1 // pred_region
      _
    $region13: #{tpu_custom_call.1} parent=1 // pred_fallthru
      _
    // Predicated region
    $region14: #{tpu_custom_call.1} parent=1 // pred_check
      _
    $region15: #{tpu_custom_call.1} parent=1 // pred_check_branch
      %32 = sbr.rel (0) target = $region17
    $region16: #{tpu_custom_call.1} parent=1 // pred_region
      _
    $region17: #{tpu_custom_call.1} parent=1 // pred_fallthru
      _
    // Predicated region
    $region18: #{tpu_custom_call.1} parent=1 // pred_check
      _
    $region19: #{tpu_custom_call.1} parent=1 // pred_check_branch
      %34 = sbr.rel (0) target = $region21
    $region20: #{tpu_custom_call.1} parent=1 // pred_region
      _
    $region21: #{tpu_custom_call.1} parent=1 // pred_fallthru
      _
    // Predicated region
    $region22: #{tpu_custom_call.1} parent=1 // pred_check
      _
    $region23: #{tpu_custom_call.1} parent=1 // pred_check_branch
      %36 = sbr.rel (0) target = $region25
    $region24: #{tpu_custom_call.1} parent=1 // pred_region
      _
    $region25: #{tpu_custom_call.1} parent=1 // pred_fallthru
      _
    // Predicated region
    $region26: #{tpu_custom_call.1} parent=1 // pred_check
      _
    $region27: #{tpu_custom_call.1} parent=1 // pred_check_branch
      %38 = sbr.rel (0) target = $region29
    $region28: #{tpu_custom_call.1} parent=1 // pred_region
      _
    $region29: #{tpu_custom_call.1} parent=1 // pred_fallthru
      _
    // Predicated region
    $region30: #{tpu_custom_call.1} parent=1 // pred_check
      _
    $region31: #{tpu_custom_call.1} parent=1 // pred_check_branch
      %40 = sbr.rel (0) target = $region33
    $region32: #{tpu_custom_call.1} parent=1 // pred_region
      %42 = dma.done [#allocation3], 512
    $region33: #{tpu_custom_call.1} parent=1 // pred_fallthru
      _
    %v43 = vld [vmem:[%s0] sm:$0xff]
    %v44 = vld [vmem:[#allocation2] sm:$0xff]
    %v45 = vld [vmem:[#allocation2 + $0x8] sm:$0xff]
    %v46 = vld [vmem:[#allocation2 + $0x10] sm:$0xff]
    %v47 = vld [vmem:[#allocation2 + $0x18] sm:$0xff]
    %v48 = vld [vmem:[%s2] sm:$0x1]
    %v50 = vperm.slane %v48, 0
    %vm52 = vcmask 261120
    %v54 = vsel %vm52, %v43, 0
    %56 = vmatpush.msra.mxu0 0.0
    %57 = vmatpush.msra.mxu0 0.0
    %58 = vmatpush.msra.mxu0 0.0
    %59 = vmatpush.msra.mxu0 0.0
    %60 = vmatpush.msra.mxu0 0.0
    %61 = vmatpush.msra.mxu0 0.0
    %62 = vmatpush.msra.mxu0 0.0
    %63 = vmatpush.msra.mxu0 0.0
    %64 = vmatpush.msra.mxu0 0.0
    %65 = vmatpush.msra.mxu0 0.0
    %66 = vmatpush.msra.mxu0 0.0
    %67 = vmatpush.msra.mxu0 0.0
    %68 = vmatpush.msra.mxu0 %v47
    %69 = vmatpush.msra.mxu0 %v46
    %70 = vmatpush.msra.mxu0 %v45
    %71 = vmatpush.msra.mxu0 %v44
    %72 = vmatmul.f32.gmra.mxu0 %v54
    %v73 = vpop.f32.mrf.mxu0
    %v74 = vadd.f32 %v50, %v73
    %75 = vdwg.mxu0
    %v76 = vmax.f32 %v74, 0.0
    %v77 = vld [vmem:[%s3] sm:$0xff]
    %v78 = vld [vmem:[%s3 + $0x8] sm:$0xff]
    %v79 = vld [vmem:[%s3 + $0x10] sm:$0xff]
    %v80 = vld [vmem:[%s3 + $0x18] sm:$0xff]
    %v81 = vld [vmem:[%s3 + $0x20] sm:$0xff]
    %v82 = vld [vmem:[%s3 + $0x28] sm:$0xff]
    %v83 = vld [vmem:[%s3 + $0x30] sm:$0xff]
    %v84 = vld [vmem:[%s3 + $0x38] sm:$0xff]
    %v85 = vld [vmem:[%s3 + $0x40] sm:$0xff]
    %v86 = vld [vmem:[%s3 + $0x48] sm:$0xff]
    %v87 = vld [vmem:[%s3 + $0x50] sm:$0xff]
    %v88 = vld [vmem:[%s3 + $0x58] sm:$0xff]
    %v89 = vld [vmem:[%s3 + $0x60] sm:$0xff]
    %v90 = vld [vmem:[%s3 + $0x68] sm:$0xff]
    %v91 = vld [vmem:[%s3 + $0x70] sm:$0xff]
    %v92 = vld [vmem:[%s3 + $0x78] sm:$0xff]
    %v93 = vld [vmem:[%s4] sm:$0x1]
    %v95 = vperm.slane %v93, 0
    %97 = vmatpush.msra.mxu0 %v92
    %98 = vmatpush.msra.mxu0 %v91
    %99 = vmatpush.msra.mxu0 %v90
    %100 = vmatpush.msra.mxu0 %v89
    %101 = vmatpush.msra.mxu0 %v88
    %102 = vmatpush.msra.mxu0 %v87
    %103 = vmatpush.msra.mxu0 %v86
    %104 = vmatpush.msra.mxu0 %v85
    %105 = vmatpush.msra.mxu0 %v84
    %106 = vmatpush.msra.mxu0 %v83
    %107 = vmatpush.msra.mxu0 %v82
    %108 = vmatpush.msra.mxu0 %v81
    %109 = vmatpush.msra.mxu0 %v80
    %110 = vmatpush.msra.mxu0 %v79
    %111 = vmatpush.msra.mxu0 %v78
    %112 = vmatpush.msra.mxu0 %v77
    %113 = vmatmul.f32.gmra.mxu0 %v76
    %v114 = vpop.f32.mrf.mxu0
    %v115 = vadd.f32 %v95, %v114
    %116 = vdwg.mxu0
    %v117 = vmax.f32 %v115, 0.0
    %v118 = vld [vmem:[%s5] sm:$0xff]
    %v119 = vld [vmem:[%s5 + $0x8] sm:$0xff]
    %v120 = vld [vmem:[%s5 + $0x10] sm:$0xff]
    %v121 = vld [vmem:[%s5 + $0x18] sm:$0xff]
    %v122 = vld [vmem:[%s5 + $0x20] sm:$0xff]
    %v123 = vld [vmem:[%s5 + $0x28] sm:$0xff]
    %v124 = vld [vmem:[%s5 + $0x30] sm:$0xff]
    %v125 = vld [vmem:[%s5 + $0x38] sm:$0xff]
    %v126 = vld [vmem:[%s5 + $0x40] sm:$0xff]
    %v127 = vld [vmem:[%s5 + $0x48] sm:$0xff]
    %v128 = vld [vmem:[%s5 + $0x50] sm:$0xff]
    %v129 = vld [vmem:[%s5 + $0x58] sm:$0xff]
    %v130 = vld [vmem:[%s5 + $0x60] sm:$0xff]
    %v131 = vld [vmem:[%s5 + $0x68] sm:$0xff]
    %v132 = vld [vmem:[%s5 + $0x70] sm:$0xff]
    %v133 = vld [vmem:[%s5 + $0x78] sm:$0xff]
    %v134 = vld [vmem:[%s6] sm:$0x1]
    %v136 = vperm.slane %v134, 0
    %138 = vmatpush.msra.mxu0 %v133
    %139 = vmatpush.msra.mxu0 %v132
    %140 = vmatpush.msra.mxu0 %v131
    %141 = vmatpush.msra.mxu0 %v130
    %142 = vmatpush.msra.mxu0 %v129
    %143 = vmatpush.msra.mxu0 %v128
    %144 = vmatpush.msra.mxu0 %v127
    %145 = vmatpush.msra.mxu0 %v126
    %146 = vmatpush.msra.mxu0 %v125
    %147 = vmatpush.msra.mxu0 %v124
    %148 = vmatpush.msra.mxu0 %v123
    %149 = vmatpush.msra.mxu0 %v122
    %150 = vmatpush.msra.mxu0 %v121
    %151 = vmatpush.msra.mxu0 %v120
    %152 = vmatpush.msra.mxu0 %v119
    %153 = vmatpush.msra.mxu0 %v118
    %154 = vmatmul.f32.gmra.mxu0 %v117
    %v155 = vpop.f32.mrf.mxu0
    %v156 = vadd.f32 %v136, %v155
    %157 = vdwg.mxu0
    %vm158 = vcmask 130048
    %159 = vst.msk [vmem:[#allocation5] sm:$0xff] %vm158, %v156
    // Predicated region
    $region34: #{tpu_custom_call.1} parent=1 // pred_check
      _
    $region35: #{tpu_custom_call.1} parent=1 // pred_check_branch
      %161 = sbr.rel (0) target = $region37
    $region36: #{tpu_custom_call.1} parent=1 // pred_region
      %163 = vsyncadd [#allocation4], 0
      %s165 = sshll.u32 [#allocation5], 4
      %s166 = int_to_ptr.vmem [resolvable:$true] %s165
      %s167 = sshll.u32 %s7, 4
      %s168 = int_to_ptr.hbm [resolvable:$true] %s167
      %170 = dma.vmem_to_hbm [thread:$0]  %s166, 128, %s168, [#allocation4]
    $region37: #{tpu_custom_call.1} parent=1 // pred_fallthru
      _
    // Predicated region
    $region38: #{tpu_custom_call.1} parent=1 // pred_check
      _
    $region39: #{tpu_custom_call.1} parent=1 // pred_check_branch
      %172 = sbr.rel (0) target = $region41
    $region40: #{tpu_custom_call.1} parent=1 // pred_region
      %174 = dma.done [#allocation4], 128
    $region41: #{tpu_custom_call.1} parent=1 // pred_fallthru
      _
    %175 = vsyncpa [#allocation3], 1
    %176 = vsyncpa [#allocation4], 1

</llo_original>
